<compile_context>
chip_gen: v7x
topology: tpu7x:2x2x1
jax: 0.10.0
libtpu: 0.0.40
codegen_flags: <defaults>
</compile_context>

<pallas_src>
import jax
import jax.numpy as jnp
from jax.experimental import pallas as pl
from jax.experimental.pallas import tpu as pltpu


def _flatten_shape(shape, start_dim, end_dim):
    """Output shape with torch.flatten(start_dim, end_dim) semantics."""
    ndim = len(shape)
    if ndim == 0:
        return (1,)
    s = start_dim % ndim
    e = end_dim % ndim
    assert s <= e, "flatten: start_dim must be <= end_dim"
    merged = 1
    for d in shape[s : e + 1]:
        merged *= d
    return tuple(shape[:s]) + (merged,) + tuple(shape[e + 1 :])


def _copy_kernel(x_ref, o_ref):
    # Trivial full-tile copy; all layout work is done by the wrapper/BlockSpecs.
    o_ref[...] = x_ref[...]


_TILE_BYTES = 8 * 1024 * 1024   # 8 MiB per tile (review: amortizes ~0.35us/step)
_VMEM_LIMIT = 48 << 20          # scoped VMEM: 2 in + 2 out buffers = 32 MiB < 48


def _sublane_multiple(itemsize):
    """Native packed sublane tile: 8 for 32-bit, 16 for 16-bit, 32 for 8-bit."""
    return 8 * max(1, 4 // int(itemsize))


def _tiled_copy(x_flat, n, dtype):
    """Copy a flat (n,) array (n % 128 == 0) through a lane-dense tiled kernel."""
    itemsize = jnp.dtype(dtype).itemsize
    cols = 128
    for c in (1024, 512, 256, 128):   # widest lane-dense factor dividing n
        if n % c == 0:
            cols = c
            break
    rows = n // cols
    sub = _sublane_multiple(itemsize)

    # Biggest tile under the 8 MiB budget, rounded to the native sublane tile.
    cap_rows = max(sub, _TILE_BYTES // (cols * itemsize))
    tile_rows = min(rows, cap_rows)
    if rows >= sub:
        tile_rows = max(sub, (tile_rows // sub) * sub)
    # else: tile_rows == rows -> full-extent block (satisfies the (8,128) rule)

    grid = (pl.cdiv(rows, tile_rows),)   # ragged last block handled by Pallas
    x2 = x_flat.reshape(rows, cols)      # layout-preserving lane-dense 2D view

    out = pl.pallas_call(
        _copy_kernel,
        out_shape=jax.ShapeDtypeStruct((rows, cols), dtype),
        grid_spec=pltpu.PrefetchScalarGridSpec(
            num_scalar_prefetch=0,
            grid=grid,
            in_specs=[pl.BlockSpec((tile_rows, cols), lambda i: (i, 0))],
            out_specs=pl.BlockSpec((tile_rows, cols), lambda i: (i, 0)),
        ),
        compiler_params=pltpu.CompilerParams(
            dimension_semantics=("parallel",),   # shard rows across v7x's 2 TCs
            vmem_limit_bytes=_VMEM_LIMIT,
        ),
        cost_estimate=pl.CostEstimate(
            flops=0, transcendentals=0, bytes_accessed=2 * n * itemsize),
    )(x2)
    return out.reshape(n)


def _tail_copy(x_tail, tail, dtype):
    """Copy a <128-element tail as a single tiny whole-array VMEM block."""
    x2 = x_tail.reshape(1, tail)
    out = pl.pallas_call(
        _copy_kernel,
        out_shape=jax.ShapeDtypeStruct((1, tail), dtype),
        in_specs=[pl.BlockSpec(memory_space=pltpu.MemorySpace.VMEM)],
        out_specs=pl.BlockSpec(memory_space=pltpu.MemorySpace.VMEM),
    )(x2)
    return out.reshape(tail)


def flatten(x, start_dim=0, end_dim=-1):
    """JAX wrapper mirroring Flatten(start_dim, end_dim).forward(x)."""
    out_shape = _flatten_shape(x.shape, start_dim, end_dim)
    n = int(x.size)
    dtype = x.dtype

    if n == 0:
        return jnp.reshape(x, out_shape)   # nothing to copy

    x_flat = jnp.reshape(x, (n,))          # metadata-only for contiguous input

    n_main = (n // 128) * 128
    tail = n - n_main

    if tail == 0:
        out_flat = _tiled_copy(x_flat, n, dtype)
    elif n_main == 0:
        out_flat = _tail_copy(x_flat, tail, dtype)
    else:
        # Lane-dense prefix through the tiled grid, tiny tail separately.
        # TODO(synk): the concatenate re-materializes the output once; it only
        # runs on the rare n % 128 != 0 path.
        main = _tiled_copy(x_flat[:n_main], n_main, dtype)
        tl = _tail_copy(x_flat[n_main:], tail, dtype)
        out_flat = jnp.concatenate([main, tl], axis=0)

    return out_flat.reshape(out_shape)


if __name__ == "__main__":
    key = jax.random.PRNGKey(0)
    x = jax.random.normal(key, (2, 4, 16, 16), dtype=jnp.float32)

    # Default module: Flatten(start_dim=0, end_dim=-1)  ->  fully flattened.
    out = flatten(x, start_dim=0, end_dim=-1)
    out = jax.block_until_ready(out)
    ref = jnp.reshape(x, (-1,))
    assert out.shape == (2 * 4 * 16 * 16,), out.shape
    assert out.dtype == ref.dtype
    assert bool(jnp.all(out == ref)), "mismatch vs jnp.reshape reference"

    # Partial flatten (start_dim=1), exercising the shape-merging logic.
    out2 = flatten(x, start_dim=1, end_dim=-1)
    out2 = jax.block_until_ready(out2)
    ref2 = jnp.reshape(x, (2, -1))
    assert out2.shape == (2, 4 * 16 * 16), out2.shape
    assert bool(jnp.all(out2 == ref2)), "mismatch vs partial-flatten reference"

    # Non-multiple-of-128 element count: exercises the prefix + tail fallback.
    x3 = jax.random.normal(key, (4, 3, 37), dtype=jnp.float32)   # n = 444
    out3 = flatten(x3, start_dim=0, end_dim=-1)
    out3 = jax.block_until_ready(out3)
    ref3 = jnp.reshape(x3, (-1,))
    assert out3.shape == (444,), out3.shape
    assert bool(jnp.all(out3 == ref3)), "mismatch vs ragged-size reference"

    print("KERNEL_OK")
</pallas_src>

<mosaic_0001>
module attributes {stable_mosaic.version = 11 : i64} {
  func.func @_copy_kernel(%arg0: i32, %arg1: memref<2x1024xf32, #tpu.memory_space<vmem>>, %arg2: memref<2x1024xf32, #tpu.memory_space<vmem>>) attributes {dimension_semantics = [#tpu.dimension_semantics<parallel>], iteration_bounds = array<i64: 1>, scalar_prefetch = 0 : i64, scratch_operands = 0 : i64, tpu.core_type = #tpu.core_type<tc>, window_params = [{transform_indices = @transform_0, window_bounds = array<i64: 2, 1024>}, {transform_indices = @transform_1, window_bounds = array<i64: 2, 1024>}]} {
    %c0 = arith.constant 0 : index
    %c0_0 = arith.constant 0 : index
    %0 = vector.load %arg1[%c0, %c0_0] : memref<2x1024xf32, #tpu.memory_space<vmem>>, vector<2x1024xf32>
    %c0_1 = arith.constant 0 : index
    %c0_2 = arith.constant 0 : index
    %1 = vector.load %arg2[%c0_1, %c0_2] : memref<2x1024xf32, #tpu.memory_space<vmem>>, vector<2x1024xf32>
    tpu.vector_store %arg2[%c0_1, %c0_2], %0 {strides = array<i32>} : memref<2x1024xf32, #tpu.memory_space<vmem>>, vector<2x1024xf32>,
    return
  }
  func.func @transform_0(%arg0: i32) -> (i32, i32) {
    %c0_i32 = arith.constant 0 : i32
    %c0_i32_0 = arith.constant 0 : i32
    return %arg0, %c0_i32 : i32, i32
  }
  func.func @transform_1(%arg0: i32) -> (i32, i32) {
    %c0_i32 = arith.constant 0 : i32
    %c0_i32_0 = arith.constant 0 : i32
    return %arg0, %c0_i32 : i32, i32
  }
}

</mosaic_0001>

<llo_original>
// kernel: tpu_custom_call.1
$region0: #{tpu_custom_call.1}
  #allocation0 [shape = 'u32[]', space=smem, size = 0x4, offset = 0x4, fixed_abs, tag = 'smem constant byte address 0x4 - core index']
  #allocation1 [shape = 'u32[144,128]{1,0:T(1,128)}', space=vmem, size = 0x12000, scoped, tag = 'internal scratch']
  %s0 = inlined_call_operand.hbm [shape: f32[2,1024], index: 0, kind: input, shape index: {}]
  %s1 = inlined_call_operand.hbm [shape: f32[2,1024], index: 1, kind: output, shape index: {}]
  %s2 = sld [smem:[#allocation0]]
  $region18: #{tpu_custom_call.1} parent=0
    _
  %s4 = ssub.s32 1, %s2
  %s5 = scalar_select 0, %s4, %s2
  $region1: #{tpu_custom_call.1} parent=0
    #allocation2 [shape = 'u8[8192]{0}', space=vmem, size = 0x2000, scoped, tag = 'input window, operand 0, single buffered']
    #allocation3 [shape = 's32[1]{0}', space=sflag, size = 0x4, scoped, tag = 'scoped memory for tpu_custom_call.1']
    #allocation4 [shape = 's32[1]{0}', space=sflag, size = 0x4, scoped, tag = 'scoped memory for tpu_custom_call.1']
    #allocation5 [shape = 'u8[8192]{0}', space=vmem, size = 0x2000, scoped, tag = 'output window, operand 0, single buffered']
    %6 = vsyncpa [#allocation3], 0
    %7 = vsyncpa [#allocation4], 0
    // Predicated region
    $region2: #{tpu_custom_call.1} parent=1 // pred_check
      _
    $region3: #{tpu_custom_call.1} parent=1 // pred_check_branch
      %9 = sbr.rel (0) target = $region5
    $region4: #{tpu_custom_call.1} parent=1 // pred_region
      %s11 = ssub.s32 256, 256
      %12 = vsyncadd [#allocation3], %s11
      %s14 = sshll.u32 [#allocation2], 4
      %s15 = int_to_ptr.vmem [resolvable:$true] %s14
      %17 = dma.hbm_to_vmem [thread:$0]  %s0, 256, %s15, [#allocation3]
    $region5: #{tpu_custom_call.1} parent=1 // pred_fallthru
      _
    // Predicated region
    $region6: #{tpu_custom_call.1} parent=1 // pred_check
      _
    $region7: #{tpu_custom_call.1} parent=1 // pred_check_branch
      %19 = sbr.rel (0) target = $region9
    $region8: #{tpu_custom_call.1} parent=1 // pred_region
      %20 = dma.done [#allocation3], 256
    $region9: #{tpu_custom_call.1} parent=1 // pred_fallthru
      _
    %v21 = vld [vmem:[#allocation2] sm:$0xff]
    %v22 = vld [vmem:[#allocation2 + $0x8] sm:$0xff]
    %23 = vst [vmem:[#allocation5] sm:$0xff] %v21
    %24 = vst [vmem:[#allocation5 + $0x8] sm:$0xff] %v22
    // Predicated region
    $region10: #{tpu_custom_call.1} parent=1 // pred_check
      _
    $region11: #{tpu_custom_call.1} parent=1 // pred_check_branch
      %26 = sbr.rel (0) target = $region13
    $region12: #{tpu_custom_call.1} parent=1 // pred_region
      %s28 = ssub.s32 256, 256
      %29 = vsyncadd [#allocation4], %s28
      %s31 = sshll.u32 [#allocation5], 4
      %s32 = int_to_ptr.vmem [resolvable:$true] %s31
      %34 = dma.vmem_to_hbm [thread:$0]  %s32, 256, %s1, [#allocation4]
    $region13: #{tpu_custom_call.1} parent=1 // pred_fallthru
      _
    // Predicated region
    $region14: #{tpu_custom_call.1} parent=1 // pred_check
      _
    $region15: #{tpu_custom_call.1} parent=1 // pred_check_branch
      %36 = sbr.rel (0) target = $region17
    $region16: #{tpu_custom_call.1} parent=1 // pred_region
      %37 = dma.done [#allocation4], 256
    $region17: #{tpu_custom_call.1} parent=1 // pred_fallthru
      _
    %38 = vsyncpa [#allocation3], 1
    %39 = vsyncpa [#allocation4], 1

</llo_original>
